<compile_context>
chip_gen: v7x
topology: tpu7x:2x2x1
jax: 0.10.0
libtpu: 0.0.40
codegen_flags: <defaults>
</compile_context>

<pallas_src>
import jax
import jax.numpy as jnp
from jax.experimental import pallas as pl
from jax.experimental.pallas import tpu as pltpu


def _round_up(n, m):
    return ((n + m - 1) // m) * m


# --------------------------------------------------------------------------- #
# Kernel
# --------------------------------------------------------------------------- #
def regressor_kernel(x_ref, w1t_ref, b1_ref, w2_ref, b2_ref, o_ref):
    # Layer 1 on the MXU: (TB, H) @ (H, 4) -> (TB, 4), f32 accumulation.
    h = jnp.dot(x_ref[...], w1t_ref[...], preferred_element_type=jnp.float32)
    h = jax.nn.sigmoid(h + b1_ref[...])          # b1 (1, 4) broadcasts over sublanes (EUP)
    # Layer 2 (K=4, N=1): VPU multiply + 4-wide lane reduce — no MXU push/drain.
    o = jnp.sum(h * w2_ref[...], axis=1, keepdims=True) + b2_ref[...]   # (TB, 1)
    o_ref[...] = jax.nn.sigmoid(o).astype(o_ref.dtype)


# --------------------------------------------------------------------------- #
# Tiling / VMEM planning
# --------------------------------------------------------------------------- #
def _vmem_plan():
    """Generation-aware budgets (v7x: 64 MiB VMEM/TC; v5e/v6e: 128 MiB)."""
    try:
        kind = jax.devices()[0].device_kind.lower()
    except Exception:
        kind = ""
    if "v7" in kind:
        return {"vmem_limit": 40 << 20, "target_slab": 8 << 20, "max_slab": 16 << 20}
    # v5e / v6e (and unknown): plenty of VMEM — go bigger.
    return {"vmem_limit": 96 << 20, "target_slab": 16 << 20, "max_slab": 40 << 20}


def _pick_batch_tile(B, row_bytes, plan):
    total_bytes = B * row_bytes
    # Enough steps that each x slab is ~target_slab bytes.
    num_steps = max(1, pl.cdiv(total_bytes, plan["target_slab"]))
    # Keep both v7x TensorCores busy whenever there is non-trivial work.
    if total_bytes > (2 << 20):
        num_steps = max(num_steps, 2)
    tile = _round_up(pl.cdiv(B, num_steps), 128)
    # Double-buffered slab must stay inside the per-generation VMEM budget.
    max_tile = max(8, (plan["max_slab"] // max(row_bytes, 1)) // 8 * 8)
    tile = min(tile, max_tile)
    # Never larger than the (8-aligned) problem itself.
    tile = min(tile, _round_up(B, 8))
    return max(8, tile)


# --------------------------------------------------------------------------- #
# Wrapper
# --------------------------------------------------------------------------- #
def regressor_forward(x, w1, b1, w2, b2, *, batch_tile=None):
    """x: (B, H).  w1: (4, H), b1: (4,), w2: (1, 4), b2: (1,) — PyTorch layout.

    Returns (B, 1) in x.dtype, matching Regressor.forward.  x may be float32
    or bfloat16 (bf16 halves HBM bytes; accumulation stays f32).
    """
    B, H = x.shape
    assert w1.shape == (4, H) and b1.shape == (4,)
    assert w2.shape == (1, 4) and b2.shape == (1,)

    plan = _vmem_plan()
    row_bytes = H * x.dtype.itemsize
    if batch_tile is None:
        batch_tile = _pick_batch_tile(B, row_bytes, plan)
    else:
        batch_tile = max(8, _round_up(int(batch_tile), 8))

    grid = (pl.cdiv(B, batch_tile),)

    # Tiny weight operands in kernel-friendly layouts (resident across steps).
    w1t = w1.T                                             # (H, 4)
    if x.dtype == jnp.bfloat16:
        w1t = w1t.astype(jnp.bfloat16)                     # native bf16 MXU path
    b1_r = b1.reshape(1, 4).astype(jnp.float32)
    w2_r = w2.reshape(1, 4).astype(jnp.float32)
    b2_r = b2.reshape(1, 1).astype(jnp.float32)

    return pl.pallas_call(
        regressor_kernel,
        out_shape=jax.ShapeDtypeStruct((B, 1), x.dtype),
        grid_spec=pltpu.PrefetchScalarGridSpec(
            num_scalar_prefetch=0,
            grid=grid,
            in_specs=[
                pl.BlockSpec((batch_tile, H), lambda i: (i, 0)),   # x slab, natural layout
                pl.BlockSpec((H, 4), lambda i: (0, 0)),            # W1^T (whole, resident)
                pl.BlockSpec((1, 4), lambda i: (0, 0)),            # b1
                pl.BlockSpec((1, 4), lambda i: (0, 0)),            # W2 row
                pl.BlockSpec((1, 1), lambda i: (0, 0)),            # b2
            ],
            out_specs=pl.BlockSpec((batch_tile, 1), lambda i: (i, 0)),
        ),
        compiler_params=pltpu.CompilerParams(
            dimension_semantics=("parallel",),        # shard steps across v7x's 2 TCs
            vmem_limit_bytes=plan["vmem_limit"],      # generation-aware budget
        ),
    )(x, w1t, b1_r, w2_r, b2_r)


# --------------------------------------------------------------------------- #
# Init + reference (for parity checks)
# --------------------------------------------------------------------------- #
def init_params(key, feature_len):
    """Matches Regressor.init_weights(): W1 ~ U(0, 1/sqrt(4)), W2 ~ U(0, 1), biases 0."""
    second_layer = 4
    k1, k2 = jax.random.split(key)
    stdv2 = 1.0 / jnp.sqrt(jnp.float32(second_layer))     # linear1.weight.shape[0] == 4
    w1 = jax.random.uniform(k1, (second_layer, feature_len),
                            dtype=jnp.float32, minval=0.0, maxval=stdv2)
    b1 = jnp.zeros((second_layer,), jnp.float32)
    w2 = jax.random.uniform(k2, (1, second_layer),
                            dtype=jnp.float32, minval=0.0, maxval=1.0)  # 1/sqrt(1)
    b2 = jnp.zeros((1,), jnp.float32)
    return w1, b1, w2, b2


def _reference(x, w1, b1, w2, b2):
    xf = x.astype(jnp.float32)
    h = jax.nn.sigmoid(xf @ w1.T + b1)
    return jax.nn.sigmoid(h @ w2.T + b2)


# --------------------------------------------------------------------------- #
# Tests
# --------------------------------------------------------------------------- #
if __name__ == "__main__":
    key = jax.random.PRNGKey(0)
    k1, k2, k3, k4, k5 = jax.random.split(key, 5)

    # Case 1: basic shape, exact parity.
    feature_len, batch = 32, 8
    x = jax.random.normal(k1, (batch, feature_len), dtype=jnp.float32)
    w1, b1, w2, b2 = init_params(k2, feature_len)
    out = jax.block_until_ready(regressor_forward(x, w1, b1, w2, b2))
    assert out.shape == (batch, 1)
    assert jnp.allclose(out, _reference(x, w1, b1, w2, b2), atol=1e-5), "mismatch (case 1)"

    # Case 2: B and H not 8/128-aligned — exercises partial-block masking.
    x2 = jax.random.normal(k3, (10, 20), dtype=jnp.float32)
    w1b, b1b, w2b, b2b = init_params(k4, 20)
    out2 = jax.block_until_ready(regressor_forward(x2, w1b, b1b, w2b, b2b))
    assert out2.shape == (10, 1)
    assert jnp.allclose(out2, _reference(x2, w1b, b1b, w2b, b2b), atol=1e-5), "mismatch (case 2)"

    # Case 3: multi-step grid with a partial final block (explicit small tile).
    x3 = jax.random.normal(k5, (300, feature_len), dtype=jnp.float32)
    out3 = jax.block_until_ready(regressor_forward(x3, w1, b1, w2, b2, batch_tile=128))
    assert out3.shape == (300, 1)
    assert jnp.allclose(out3, _reference(x3, w1, b1, w2, b2), atol=1e-5), "mismatch (case 3)"

    # Case 4: bf16-streamed x (halved HBM bytes, f32 accumulation), relaxed tolerance.
    out4 = jax.block_until_ready(regressor_forward(x.astype(jnp.bfloat16), w1, b1, w2, b2))
    assert out4.shape == (batch, 1)
    assert jnp.allclose(out4.astype(jnp.float32), _reference(x, w1, b1, w2, b2),
                        atol=3e-2), "mismatch (case 4, bf16)"

    print("KERNEL_OK")
</pallas_src>

<mosaic_0001>
module attributes {stable_mosaic.version = 11 : i64} {
  func.func @regressor_kernel(%arg0: i32, %arg1: memref<8x32xf32, #tpu.memory_space<vmem>>, %arg2: memref<32x4xf32, #tpu.memory_space<vmem>>, %arg3: memref<1x4xf32, #tpu.memory_space<vmem>>, %arg4: memref<1x4xf32, #tpu.memory_space<vmem>>, %arg5: memref<1x1xf32, #tpu.memory_space<vmem>>, %arg6: memref<8x1xf32, #tpu.memory_space<vmem>>) attributes {dimension_semantics = [#tpu.dimension_semantics<parallel>], iteration_bounds = array<i64: 1>, scalar_prefetch = 0 : i64, scratch_operands = 0 : i64, tpu.core_type = #tpu.core_type<tc>, window_params = [{transform_indices = @transform_0, window_bounds = array<i64: 8, 32>}, {pipeline_mode = #tpu.pipeline_mode<synchronous>, transform_indices = @transform_1, window_bounds = array<i64: 32, 4>}, {pipeline_mode = #tpu.pipeline_mode<synchronous>, transform_indices = @transform_2, window_bounds = array<i64: 1, 4>}, {pipeline_mode = #tpu.pipeline_mode<synchronous>, transform_indices = @transform_3, window_bounds = array<i64: 1, 4>}, {pipeline_mode = #tpu.pipeline_mode<synchronous>, transform_indices = @transform_4, window_bounds = array<i64: 1, 1>}, {transform_indices = @transform_5, window_bounds = array<i64: 8, 1>}]} {
    %c0 = arith.constant 0 : index
    %c0_0 = arith.constant 0 : index
    %0 = vector.load %arg1[%c0, %c0_0] : memref<8x32xf32, #tpu.memory_space<vmem>>, vector<8x32xf32>
    %c0_1 = arith.constant 0 : index
    %c0_2 = arith.constant 0 : index
    %1 = vector.load %arg2[%c0_1, %c0_2] : memref<32x4xf32, #tpu.memory_space<vmem>>, vector<32x4xf32>
    %cst = arith.constant dense<0.000000e+00> : vector<8x4xf32>
    %2 = tpu.matmul %0, %1, %cst {dimension_numbers = #tpu.dot_dimension_numbers<[1], [0], [0], [1], [0, 0, 1, 1], [], []>} : vector<8x32xf32>, vector<32x4xf32>, vector<8x4xf32> -> vector<8x4xf32>
    %c0_3 = arith.constant 0 : index
    %c0_4 = arith.constant 0 : index
    %3 = vector.load %arg3[%c0_3, %c0_4] : memref<1x4xf32, #tpu.memory_space<vmem>>, vector<1x4xf32>
    %4 = vector.broadcast %3 : vector<1x4xf32> to vector<8x4xf32>
    %5 = arith.addf %2, %4 : vector<8x4xf32>
    %6 = arith.negf %5 : vector<8x4xf32>
    %7 = math.exp %6 : vector<8x4xf32>
    %cst_5 = arith.constant 1.000000e+00 : f32
    %8 = vector.broadcast %cst_5 : f32 to vector<8x4xf32>
    %9 = arith.addf %8, %7 : vector<8x4xf32>
    %10 = arith.divf %8, %9 : vector<8x4xf32>
    %c0_6 = arith.constant 0 : index
    %c0_7 = arith.constant 0 : index
    %11 = vector.load %arg4[%c0_6, %c0_7] : memref<1x4xf32, #tpu.memory_space<vmem>>, vector<1x4xf32>
    %12 = vector.broadcast %11 : vector<1x4xf32> to vector<8x4xf32>
    %13 = arith.mulf %10, %12 : vector<8x4xf32>
    %cst_8 = arith.constant dense<0.000000e+00> : vector<8xf32>
    %14 = vector.multi_reduction <add>, %13, %cst_8 [1] : vector<8x4xf32> to vector<8xf32>
    %15 = vector.shape_cast %14 : vector<8xf32> to vector<8x1xf32>
    %c0_9 = arith.constant 0 : index
    %c0_10 = arith.constant 0 : index
    %16 = vector.load %arg5[%c0_9, %c0_10] : memref<1x1xf32, #tpu.memory_space<vmem>>, vector<1x1xf32>
    %17 = vector.broadcast %16 : vector<1x1xf32> to vector<8x1xf32>
    %18 = arith.addf %15, %17 : vector<8x1xf32>
    %19 = arith.negf %18 : vector<8x1xf32>
    %20 = math.exp %19 : vector<8x1xf32>
    %cst_11 = arith.constant 1.000000e+00 : f32
    %21 = vector.broadcast %cst_11 : f32 to vector<8x1xf32>
    %22 = arith.addf %21, %20 : vector<8x1xf32>
    %23 = arith.divf %21, %22 : vector<8x1xf32>
    %c0_12 = arith.constant 0 : index
    %c0_13 = arith.constant 0 : index
    %24 = vector.load %arg6[%c0_12, %c0_13] : memref<8x1xf32, #tpu.memory_space<vmem>>, vector<8x1xf32>
    tpu.vector_store %arg6[%c0_12, %c0_13], %23 {strides = array<i32>} : memref<8x1xf32, #tpu.memory_space<vmem>>, vector<8x1xf32>,
    return
  }
  func.func @transform_0(%arg0: i32) -> (i32, i32) {
    %c0_i32 = arith.constant 0 : i32
    %c0_i32_0 = arith.constant 0 : i32
    return %arg0, %c0_i32 : i32, i32
  }
  func.func @transform_1(%arg0: i32) -> (i32, i32) {
    %c0_i32 = arith.constant 0 : i32
    %c0_i32_0 = arith.constant 0 : i32
    %c0_i32_1 = arith.constant 0 : i32
    return %c0_i32, %c0_i32_0 : i32, i32
  }
  func.func @transform_2(%arg0: i32) -> (i32, i32) {
    %c0_i32 = arith.constant 0 : i32
    %c0_i32_0 = arith.constant 0 : i32
    %c0_i32_1 = arith.constant 0 : i32
    return %c0_i32, %c0_i32_0 : i32, i32
  }
  func.func @transform_3(%arg0: i32) -> (i32, i32) {
    %c0_i32 = arith.constant 0 : i32
    %c0_i32_0 = arith.constant 0 : i32
    %c0_i32_1 = arith.constant 0 : i32
    return %c0_i32, %c0_i32_0 : i32, i32
  }
  func.func @transform_4(%arg0: i32) -> (i32, i32) {
    %c0_i32 = arith.constant 0 : i32
    %c0_i32_0 = arith.constant 0 : i32
    %c0_i32_1 = arith.constant 0 : i32
    return %c0_i32, %c0_i32_0 : i32, i32
  }
  func.func @transform_5(%arg0: i32) -> (i32, i32) {
    %c0_i32 = arith.constant 0 : i32
    %c0_i32_0 = arith.constant 0 : i32
    return %arg0, %c0_i32 : i32, i32
  }
}

</mosaic_0001>

<llo_original>
// kernel: tpu_custom_call.1
$region0: #{tpu_custom_call.1}
  #allocation0 [shape = 'u32[]', space=smem, size = 0x4, offset = 0x4, fixed_abs, tag = 'smem constant byte address 0x4 - core index']
  #allocation1 [shape = 'u32[144,128]{1,0:T(1,128)}', space=vmem, size = 0x12000, scoped, tag = 'internal scratch']
  #allocation2 [shape = 'f32[1,1]{1,0:T(1,128)S(1)}', space=vmem, size = 0x200, scoped, tag = 'scoped memory for tpu_custom_call.1']
  %s0 = inlined_call_operand.hbm [shape: f32[8,32], index: 0, kind: input, shape index: {}]
  %s1 = inlined_call_operand.hbm [shape: f32[32,4], index: 1, kind: input, shape index: {}]
  %s2 = inlined_call_operand.hbm [shape: f32[1,4], index: 2, kind: input, shape index: {}]
  %s3 = inlined_call_operand.hbm [shape: f32[1,4], index: 3, kind: input, shape index: {}]
  %s4 = inlined_call_operand.<no memory space> [shape: f32[1,1], index: 4, kind: input, shape index: {}]
  %s5 = inlined_call_operand.hbm [shape: f32[8,1], index: 5, kind: output, shape index: {}]
  %s6 = sld [smem:[#allocation0]]
  $region46: #{tpu_custom_call.1} parent=0
    _
  %s8 = ssub.s32 1, %s6
  %s9 = scalar_select 0, %s8, %s6
  %v10 = vstv %s4
  %11 = vst [vmem:[#allocation2] sm:$0x1] %v10
  $region1: #{tpu_custom_call.1} parent=0
    #allocation3 [shape = 'u8[4096]{0}', space=vmem, size = 0x1000, scoped, tag = 'input window, operand 0, single buffered']
    #allocation4 [shape = 's32[1]{0}', space=sflag, size = 0x4, scoped, tag = 'scoped memory for tpu_custom_call.1']
    #allocation5 [shape = 's32[1]{0}', space=sflag, size = 0x4, scoped, tag = 'scoped memory for tpu_custom_call.1']
    #allocation6 [shape = 'u8[16384]{0}', space=vmem, size = 0x4000, scoped, tag = 'input window, operand 1, single buffered']
    #allocation7 [shape = 's32[1]{0}', space=sflag, size = 0x4, scoped, tag = 'scoped memory for tpu_custom_call.1']
    #allocation8 [shape = 'u8[512]{0}', space=vmem, size = 0x400, scoped, tag = 'input window, operand 2, single buffered']
    #allocation9 [shape = 'u8[512]{0}', space=vmem, size = 0x400, scoped, tag = 'input window, operand 3, single buffered']
    #allocation10 [shape = 's32[1]{0}', space=sflag, size = 0x4, scoped, tag = 'scoped memory for tpu_custom_call.1']
    #allocation11 [shape = 'u8[4096]{0}', space=vmem, size = 0x1000, scoped, tag = 'output window, operand 0, single buffered']
    %12 = vsyncpa [#allocation4], 0
    %13 = vsyncpa [#allocation7], 0
    %14 = vsyncpa [#allocation10], 0
    %15 = vsyncpa [#allocation5], 0
    // Predicated region
    $region2: #{tpu_custom_call.1} parent=1 // pred_check
      _
    $region3: #{tpu_custom_call.1} parent=1 // pred_check_branch
      %17 = sbr.rel (0) target = $region5
    $region4: #{tpu_custom_call.1} parent=1 // pred_region
      %s19 = ssub.s32 128, 128
      %20 = vsyncadd [#allocation4], %s19
      %s22 = sshll.u32 [#allocation3], 4
      %s23 = int_to_ptr.vmem [resolvable:$true] %s22
      %25 = dma.hbm_to_vmem [thread:$0]  %s0, 128, %s23, [#allocation4]
    $region5: #{tpu_custom_call.1} parent=1 // pred_fallthru
      _
    // Predicated region
    $region6: #{tpu_custom_call.1} parent=1 // pred_check
      _
    $region7: #{tpu_custom_call.1} parent=1 // pred_check_branch
      %27 = sbr.rel (0) target = $region9
    $region8: #{tpu_custom_call.1} parent=1 // pred_region
      %s29 = ssub.s32 512, 512
      %30 = vsyncadd [#allocation7], %s29
      %s31 = sshll.u32 [#allocation6], 4
      %s32 = int_to_ptr.vmem [resolvable:$true] %s31
      %37 = dma.hbm_to_vmem [thread:$0]  %s1, 512, %s32, [#allocation7], 128, 128, 8
    $region9: #{tpu_custom_call.1} parent=1 // pred_fallthru
      _
    // Predicated region
    $region10: #{tpu_custom_call.1} parent=1 // pred_check
      _
    $region11: #{tpu_custom_call.1} parent=1 // pred_check_branch
      %39 = sbr.rel (0) target = $region13
    $region12: #{tpu_custom_call.1} parent=1 // pred_region
      %s41 = ssub.s32 16, 16
      %42 = vsyncadd [#allocation7], %s41
      %s44 = sshll.u32 [#allocation8], 4
      %s45 = int_to_ptr.vmem [resolvable:$true] %s44
      %47 = dma.hbm_to_vmem [thread:$0]  %s2, 16, %s45, [#allocation7]
    $region13: #{tpu_custom_call.1} parent=1 // pred_fallthru
      _
    // Predicated region
    $region14: #{tpu_custom_call.1} parent=1 // pred_check
      _
    $region15: #{tpu_custom_call.1} parent=1 // pred_check_branch
      %49 = sbr.rel (0) target = $region17
    $region16: #{tpu_custom_call.1} parent=1 // pred_region
      %s51 = ssub.s32 16, 16
      %52 = vsyncadd [#allocation10], %s51
      %s54 = sshll.u32 [#allocation9], 4
      %s55 = int_to_ptr.vmem [resolvable:$true] %s54
      %57 = dma.hbm_to_vmem [thread:$0]  %s3, 16, %s55, [#allocation10]
    $region17: #{tpu_custom_call.1} parent=1 // pred_fallthru
      _
    // Predicated region
    $region18: #{tpu_custom_call.1} parent=1 // pred_check
      _
    $region19: #{tpu_custom_call.1} parent=1 // pred_check_branch
      %59 = sbr.rel (0) target = $region21
    $region20: #{tpu_custom_call.1} parent=1 // pred_region
      _
    $region21: #{tpu_custom_call.1} parent=1 // pred_fallthru
      _
    // Predicated region
    $region22: #{tpu_custom_call.1} parent=1 // pred_check
      _
    $region23: #{tpu_custom_call.1} parent=1 // pred_check_branch
      %61 = sbr.rel (0) target = $region25
    $region24: #{tpu_custom_call.1} parent=1 // pred_region
      %62 = dma.done [#allocation4], 128
    $region25: #{tpu_custom_call.1} parent=1 // pred_fallthru
      _
    // Predicated region
    $region26: #{tpu_custom_call.1} parent=1 // pred_check
      _
    $region27: #{tpu_custom_call.1} parent=1 // pred_check_branch
      %64 = sbr.rel (0) target = $region29
    $region28: #{tpu_custom_call.1} parent=1 // pred_region
      %65 = dma.done [#allocation7], 512
    $region29: #{tpu_custom_call.1} parent=1 // pred_fallthru
      _
    // Predicated region
    $region30: #{tpu_custom_call.1} parent=1 // pred_check
      _
    $region31: #{tpu_custom_call.1} parent=1 // pred_check_branch
      %67 = sbr.rel (0) target = $region33
    $region32: #{tpu_custom_call.1} parent=1 // pred_region
      %68 = dma.done [#allocation7], 16
    $region33: #{tpu_custom_call.1} parent=1 // pred_fallthru
      _
    // Predicated region
    $region34: #{tpu_custom_call.1} parent=1 // pred_check
      _
    $region35: #{tpu_custom_call.1} parent=1 // pred_check_branch
      %70 = sbr.rel (0) target = $region37
    $region36: #{tpu_custom_call.1} parent=1 // pred_region
      %71 = dma.done [#allocation10], 16
    $region37: #{tpu_custom_call.1} parent=1 // pred_fallthru
      _
    %v72 = vld [vmem:[#allocation3] sm:$0xff]
    %v73 = vld [vmem:[#allocation6] sm:$0xff]
    %v74 = vld [vmem:[#allocation6 + $0x8] sm:$0xff]
    %v75 = vld [vmem:[#allocation6 + $0x10] sm:$0xff]
    %v76 = vld [vmem:[#allocation6 + $0x18] sm:$0xff]
    %v77 = vld [vmem:[#allocation8] sm:$0x1]
    %v79 = vlaneseq
    %v80 = vshrl.u32 %v79, 7
    %v81 = vsub.s32 0, %v80
    %v82 = vrot.slane %v77, %v81
    %vm84 = vcmask 261120
    %v86 = vsel %vm84, %v72, 0
    %88 = vmatprep.subr.mxu0 0.0
    %89 = vmatpush1.msra.mxu0 %v73
    %90 = vmatprep.subr.mxu0 0.0
    %91 = vmatpush1.msra.mxu0 %v74
    %92 = vmatprep.subr.mxu0 0.0
    %93 = vmatpush1.msra.mxu0 %v75
    %94 = vmatprep.subr.mxu0 0.0
    %95 = vmatpush1.msra.mxu0 %v76
    %96 = vmatprep.subr.mxu0 0.0
    %97 = vmatpush1.msra.mxu0 0.0
    %98 = vmatprep.subr.mxu0 0.0
    %99 = vmatpush1.msra.mxu0 0.0
    %100 = vmatprep.subr.mxu0 0.0
    %101 = vmatpush1.msra.mxu0 0.0
    %102 = vmatprep.subr.mxu0 0.0
    %103 = vmatpush1.msra.mxu0 0.0
    %104 = vmatprep.subr.mxu0 0.0
    %105 = vmatpush1.msra.mxu0 0.0
    %106 = vmatprep.subr.mxu0 0.0
    %107 = vmatpush1.msra.mxu0 0.0
    %108 = vmatprep.subr.mxu0 0.0
    %109 = vmatpush1.msra.mxu0 0.0
    %110 = vmatprep.subr.mxu0 0.0
    %111 = vmatpush1.msra.mxu0 0.0
    %112 = vmatprep.subr.mxu0 0.0
    %113 = vmatpush1.msra.mxu0 0.0
    %114 = vmatprep.subr.mxu0 0.0
    %115 = vmatpush1.msra.mxu0 0.0
    %116 = vmatprep.subr.mxu0 0.0
    %117 = vmatpush1.msra.mxu0 0.0
    %118 = vmatprep.subr.mxu0 0.0
    %119 = vmatpush1.msra.mxu0 0.0
    %120 = vmatprep.subr.mxu0 0.0
    %121 = vmatpush1.msra.mxu0 0.0
    %122 = vmatprep.subr.mxu0 0.0
    %123 = vmatpush1.msra.mxu0 0.0
    %124 = vmatprep.subr.mxu0 0.0
    %125 = vmatpush1.msra.mxu0 0.0
    %126 = vmatprep.subr.mxu0 0.0
    %127 = vmatpush1.msra.mxu0 0.0
    %128 = vmatprep.subr.mxu0 0.0
    %129 = vmatpush1.msra.mxu0 0.0
    %130 = vmatprep.subr.mxu0 0.0
    %131 = vmatpush1.msra.mxu0 0.0
    %132 = vmatprep.subr.mxu0 0.0
    %133 = vmatpush1.msra.mxu0 0.0
    %134 = vmatprep.subr.mxu0 0.0
    %135 = vmatpush1.msra.mxu0 0.0
    %136 = vmatprep.subr.mxu0 0.0
    %137 = vmatpush1.msra.mxu0 0.0
    %138 = vmatprep.subr.mxu0 0.0
    %139 = vmatpush1.msra.mxu0 0.0
    %140 = vmatprep.subr.mxu0 0.0
    %141 = vmatpush1.msra.mxu0 0.0
    %142 = vmatprep.subr.mxu0 0.0
    %143 = vmatpush1.msra.mxu0 0.0
    %144 = vmatprep.subr.mxu0 0.0
    %145 = vmatpush1.msra.mxu0 0.0
    %146 = vmatprep.subr.mxu0 0.0
    %147 = vmatpush1.msra.mxu0 0.0
    %148 = vmatprep.subr.mxu0 0.0
    %149 = vmatpush1.msra.mxu0 0.0
    %150 = vmatprep.subr.mxu0 0.0
    %151 = vmatpush1.msra.mxu0 0.0
    %152 = vmatprep.mubr.f32.mxu0 0.0
    %153 = vmatmul.mubr.f32.gmra.mrb[0].mxu0 %v86
    %v154 = vpop.f32.mrb[0].mxu0
    %v155 = vadd.f32 %v82, %v154
    %v156 = vpop.f32.mrb[0].mxu0
    %157 = vdwg.mxu0
    %v158 = vxor.u32 %v155, 2147483648
    %v159 = vmul.f32 %v158, 1.442695
    %v160 = vpow.pop %v159
    %v161 = vadd.f32 %v160, 1.0
    %v162 = vrcp.pop %v161
    %v163 = vmul.f32 1.0, %v162
    %v164 = vld [vmem:[#allocation9] sm:$0x1]
    %v166 = vlaneseq
    %v167 = vshrl.u32 %v166, 7
    %v168 = vsub.s32 0, %v167
    %v169 = vrot.slane %v164, %v168
    %v171 = vmul.f32 %v163, %v169
    %vm172 = vcmask 31744
    %v173 = vsel %vm172, %v171, 0.0
    %174 = vadd.xlane.f32.xlu0 %v173
    %v175 = vpop.xlane.xlu0 %174
    %v176 = vld [vmem:[#allocation2] sm:$0x1]
    %v178 = vlaneseq
    %v179 = vshrl.u32 %v178, 7
    %v180 = vsub.s32 0, %v179
    %v181 = vrot.slane %v176, %v180
    %v183 = vadd.f32 %v175, %v181
    %v184 = vxor.u32 %v183, 2147483648
    %v185 = vmul.f32 %v184, 1.442695
    %v186 = vpow.pop %v185
    %v187 = vadd.f32 %v186, 1.0
    %v188 = vrcp.pop %v187
    %v189 = vmul.f32 1.0, %v188
    %vm190 = vcmask 7168
    %191 = vst.msk [vmem:[#allocation11] sm:$0xff] %vm190, %v189
    // Predicated region
    $region38: #{tpu_custom_call.1} parent=1 // pred_check
      _
    $region39: #{tpu_custom_call.1} parent=1 // pred_check_branch
      %193 = sbr.rel (0) target = $region41
    $region40: #{tpu_custom_call.1} parent=1 // pred_region
      %s195 = ssub.s32 128, 128
      %196 = vsyncadd [#allocation5], %s195
      %s198 = sshll.u32 [#allocation11], 4
      %s199 = int_to_ptr.vmem [resolvable:$true] %s198
      %201 = dma.vmem_to_hbm [thread:$0]  %s199, 128, %s5, [#allocation5]
    $region41: #{tpu_custom_call.1} parent=1 // pred_fallthru
      _
    // Predicated region
    $region42: #{tpu_custom_call.1} parent=1 // pred_check
      _
    $region43: #{tpu_custom_call.1} parent=1 // pred_check_branch
      %203 = sbr.rel (0) target = $region45
    $region44: #{tpu_custom_call.1} parent=1 // pred_region
      %204 = dma.done [#allocation5], 128
    $region45: #{tpu_custom_call.1} parent=1 // pred_fallthru
      _
    %205 = vsyncpa [#allocation4], 1
    %206 = vsyncpa [#allocation7], 1
    %207 = vsyncpa [#allocation10], 1
    %208 = vsyncpa [#allocation5], 1

</llo_original>
